<compile_context>
chip_gen: v7x
topology: tpu7x:2x2x1
jax: 0.10.0
libtpu: 0.0.40
codegen_flags: <defaults>
</compile_context>

<pallas_src>
import functools

import jax
import jax.numpy as jnp
from jax import lax
from jax.experimental import pallas as pl
from jax.experimental.pallas import tpu as pltpu


# ---------------------------------------------------------------------------
# Kernel body
# ---------------------------------------------------------------------------

def _attn_body(q, k, v, mask, ctx_ref, attn_ref, *, scale, causal, l_valid,
               mxu_bf16):
    # q: (BB, TQ, D)   k, v: (BB, Lp, D)   mask: (BB|1, TQ, Lp) int8 or None
    qs = q * scale if scale else q            # fold static scale into q (TQ*D mults)

    if mxu_bf16 and q.dtype == jnp.float32:   # opt-in: bf16 MXU, f32 accumulate
        lhs, rhs = qs.astype(jnp.bfloat16), k.astype(jnp.bfloat16)
    else:
        lhs, rhs = qs, k

    # scores = q @ k^T, contracting over D of both operands — no materialized
    # transpose; the batched dot_general maps straight onto the MXU.
    s = lax.dot_general(lhs, rhs,
                        dimension_numbers=(((2,), (2,)), ((0,), (0,))),
                        preferred_element_type=jnp.float32)      # (BB, TQ, Lp)

    if mask is not None:
        # masked_fill_(attn_mask, -inf); a fully-masked row yields NaN, same
        # as the PyTorch module.
        s = jnp.where(mask != 0, -jnp.inf, s)

    if causal or (l_valid is not None):
        col = lax.broadcasted_iota(jnp.int32, s.shape, 2)
        if l_valid is not None:               # padded keys: static bound, no DMA
            s = jnp.where(col >= l_valid, -jnp.inf, s)
        if causal:                            # in-kernel causal mask: no L^2 DMA
            row = (pl.program_id(1) * q.shape[1]
                   + lax.broadcasted_iota(jnp.int32, s.shape, 1))
            s = jnp.where(col > row, -jnp.inf, s)

    # softmax over the key axis (dim=2 in the PyTorch module)
    s_max = jnp.max(s, axis=-1, keepdims=True)
    p = jnp.exp(s - s_max)
    denom = jnp.sum(p, axis=-1, keepdims=True)
    # Exact reciprocal: denom is only (BB, TQ, 1) so approx saves nothing, and
    # exactness keeps the returned probabilities summing to 1.
    p = p * pl.reciprocal(denom, approx=False)

    # Cast p once; reuse for the attention store and the PV matmul when the
    # dtypes agree (saves a full (TQ, Lp) VPU cast pass).
    pv_dtype = jnp.bfloat16 if (mxu_bf16 and v.dtype == jnp.float32) else v.dtype
    pv = p.astype(pv_dtype)
    if jnp.dtype(attn_ref.dtype) == jnp.dtype(pv_dtype):
        attn_ref[...] = pv
    else:
        attn_ref[...] = p.astype(attn_ref.dtype)

    # context = attention @ v + q  (residual with x = q, unscaled)
    ctx = lax.dot_general(pv, v.astype(pv_dtype),
                          dimension_numbers=(((2,), (1,)), ((0,), (0,))),
                          preferred_element_type=jnp.float32)    # (BB, TQ, D)
    ctx_ref[...] = (ctx + q.astype(jnp.float32)).astype(ctx_ref.dtype)


def _attn_kernel_nomask(q_ref, k_ref, v_ref, ctx_ref, attn_ref, **kw):
    _attn_body(q_ref[...], k_ref[...], v_ref[...], None, ctx_ref, attn_ref, **kw)


def _attn_kernel_mask(q_ref, k_ref, v_ref, m_ref, ctx_ref, attn_ref, **kw):
    _attn_body(q_ref[...], k_ref[...], v_ref[...], m_ref[...], ctx_ref, attn_ref, **kw)


# ---------------------------------------------------------------------------
# VMEM-aware tiling heuristics
# ---------------------------------------------------------------------------

def _vmem_limit_bytes():
    """~3/4 of physical VMEM (v5e/v6e: 128 MiB -> ~96 MiB, v7x: 64 MiB -> 48 MiB)."""
    try:
        phys = pltpu.get_tpu_info().vmem_capacity_bytes
    except Exception:
        phys = 64 << 20
    return int(3 * phys // 4)


def _select_tiling(B, L, D, q_bytes, kv_bytes, attn_bytes, mask_mode, budget,
                   q_tile=None, kv_buffers=None):
    """Pick (bb, tq, Lp, kv_bufs) against an explicit per-step VMEM budget.

    Counts double-buffered q/ctx/attention blocks, the f32 score/prob
    intermediates, resident K/V and the int8 mask block.  Bigger tiles that
    actually fit reach 85%+ of HBM roofline; spilling loses far more, so the
    budget (not a fixed ladder) decides the tile.
    """
    # Fold several batch elements per grid step for tiny L: this amortizes the
    # ~0.35us/step overhead only (each batch element is still its own MXU pass
    # and for L < 128 the attention stores stay lane-masked).
    if L >= 256:
        bb = 1
    else:
        target = min(B, max(1, 256 // max(L, 1)))
        bb = 1
        for cand in range(target, 0, -1):
            if B % cand == 0:
                bb = cand
                break

    def step_bytes(tq, Lp, kv_bufs):
        mask_bb = 0 if mask_mode == 0 else (1 if mask_mode == 1 else bb)
        q_blk = 2 * bb * tq * D * q_bytes               # double-buffered q
        ctx_blk = 2 * bb * tq * D * q_bytes             # double-buffered context
        attn_blk = 2 * bb * tq * Lp * attn_bytes        # double-buffered attention out
        interm = 2 * bb * tq * Lp * 4                   # f32 scores + probs scratch
        kv_blk = kv_bufs * 2 * bb * Lp * D * kv_bytes   # resident K and V
        mask_blk = 2 * mask_bb * tq * Lp                # int8 mask
        return q_blk + ctx_blk + attn_blk + interm + kv_blk + mask_blk

    def pick_kv_bufs(Lp):
        if kv_buffers is not None:
            return int(kv_buffers)
        # K/V index_map is constant over the query-tile axis, so their second
        # buffer only helps at batch-block boundaries; single-buffer them when
        # the extra copy would eat a meaningful slice of the budget.
        return 1 if (2 * bb * Lp * D * kv_bytes) > budget // 8 else 2

    if q_tile is not None:
        tq = int(q_tile)
        assert tq % 8 == 0 or tq == L, "q_tile must be a multiple of 8"
        Lp = L if L % tq == 0 else ((L + tq - 1) // tq) * tq
        return bb, tq, Lp, pick_kv_bufs(Lp)

    # 1) whole-sequence query block if it fits the budget.
    kvb = pick_kv_bufs(L)
    if step_bytes(L, L, kvb) <= budget:
        return bb, L, L, kvb

    # 2) tile the query rows; pad L to a multiple of 128 if needed (pad keys
    #    are masked in-kernel) so tiles stay lane/sublane friendly, then take
    #    the largest multiple-of-128 tile that fits.
    Lp = L if L % 128 == 0 else ((L + 127) // 128) * 128
    kvb = pick_kv_bufs(Lp)
    tq = 128
    for cand in (1024, 768, 512, 384, 256, 128):
        if Lp % cand == 0 and step_bytes(cand, Lp, kvb) <= budget:
            tq = cand
            break
    return bb, tq, Lp, kvb


# ---------------------------------------------------------------------------
# Public wrapper
# ---------------------------------------------------------------------------

def scaled_dot_product_attention(q, k, v, scale=None, attn_mask=None, *,
                                 causal=False,
                                 attn_dtype=jnp.bfloat16,
                                 mxu_bf16=False,
                                 q_tile=None,
                                 kv_buffers=None):
    """Pallas TPU scaled dot-product attention with residual, as in the module.

    q, k, v: (B, L, D).  attn_mask: optional (L, L), (1, L, L) or (B, L, L)
    boolean/int mask (nonzero = masked, filled with -inf).  scale: optional
    static python float.  causal=True builds an upper-triangular mask
    in-kernel (no mask DMA).  Returns (context (B, L, D) in q.dtype,
    attention (B, L, L) in `attn_dtype`).

    attn_dtype defaults to bfloat16: for typical D the kernel is HBM-bound on
    the B*L*L attention writeback, so halving that stream is the main roofline
    lever.  Pass attn_dtype=jnp.float32 for full-precision probabilities.
    mxu_bf16=True runs the two matmuls with bf16 operands / f32 accumulation.
    """
    B, L, D = q.shape
    assert k.shape == (B, L, D) and v.shape == (B, L, D)
    attn_dtype = jnp.dtype(attn_dtype if attn_dtype is not None else q.dtype)
    # NOTE: mirrors PyTorch's `if scale:` — scale == 0.0 means "no scaling".
    scale = scale if scale else None

    # Mask DMA dedup: a batch-broadcast mask is streamed once per step instead
    # of once per batch element (removes a full L^2 HBM stream per batch).
    mask_mode = 0                              # 0: none, 1: broadcast, 2: per-batch
    if attn_mask is not None:
        if attn_mask.ndim == 2:
            attn_mask = attn_mask[None]
        assert attn_mask.shape[1:] == (L, L)
        if attn_mask.shape[0] == 1:
            mask_mode = 1
        else:
            assert attn_mask.shape[0] == B
            mask_mode = 2

    limit = _vmem_limit_bytes()
    budget = (limit * 17) // 20                # ~85%: headroom for compiler scratch
    q_bytes = jnp.dtype(q.dtype).itemsize
    kv_bytes = jnp.dtype(k.dtype).itemsize
    bb, tq, Lp, kv_bufs = _select_tiling(B, L, D, q_bytes, kv_bytes,
                                         attn_dtype.itemsize, mask_mode, budget,
                                         q_tile=q_tile, kv_buffers=kv_buffers)

    # Pad the sequence axis when L is not tileable; padded keys are masked
    # in-kernel from the static bound (no extra mask DMA) and padded rows /
    # columns are sliced off below.
    l_valid = None
    if Lp != L:
        pad = Lp - L
        q = jnp.pad(q, ((0, 0), (0, pad), (0, 0)))
        k = jnp.pad(k, ((0, 0), (0, pad), (0, 0)))
        v = jnp.pad(v, ((0, 0), (0, pad), (0, 0)))
        if attn_mask is not None:
            attn_mask = jnp.pad(attn_mask, ((0, 0), (0, pad), (0, pad)))
        l_valid = L

    grid = (B // bb, Lp // tq)

    q_spec = pl.BlockSpec((bb, tq, D), lambda b, i: (b, i, 0))
    if kv_bufs == 1:
        kv_spec = pl.BlockSpec((bb, Lp, D), lambda b, i: (b, 0, 0),
                               pipeline_mode=pl.Buffered(1))      # resident K/V, single buffer
    else:
        kv_spec = pl.BlockSpec((bb, Lp, D), lambda b, i: (b, 0, 0))
    ctx_spec = pl.BlockSpec((bb, tq, D), lambda b, i: (b, i, 0))
    attn_spec = pl.BlockSpec((bb, tq, Lp), lambda b, i: (b, i, 0))

    out_shape = (
        jax.ShapeDtypeStruct((B, Lp, D), q.dtype),        # context
        jax.ShapeDtypeStruct((B, Lp, Lp), attn_dtype),    # attention probabilities
    )

    kernel_kw = dict(scale=scale, causal=causal, l_valid=l_valid,
                     mxu_bf16=mxu_bf16)
    if attn_mask is None:
        kernel = functools.partial(_attn_kernel_nomask, **kernel_kw)
        in_specs = [q_spec, kv_spec, kv_spec]
        args = (q, k, v)
    else:
        kernel = functools.partial(_attn_kernel_mask, **kernel_kw)
        if mask_mode == 1:
            mask_spec = pl.BlockSpec((1, tq, Lp), lambda b, i: (0, i, 0))
        else:
            mask_spec = pl.BlockSpec((bb, tq, Lp), lambda b, i: (b, i, 0))
        in_specs = [q_spec, kv_spec, kv_spec, mask_spec]
        args = (q, k, v, attn_mask.astype(jnp.int8))      # 4x less HBM than int32

    context, attention = pl.pallas_call(
        kernel,
        out_shape=out_shape,
        grid_spec=pltpu.PrefetchScalarGridSpec(
            num_scalar_prefetch=0,
            grid=grid,
            in_specs=in_specs,
            out_specs=[ctx_spec, attn_spec],
        ),
        compiler_params=pltpu.CompilerParams(
            dimension_semantics=("parallel", "parallel"),
            vmem_limit_bytes=limit,
        ),
    )(*args)

    if Lp != L:
        context = context[:, :L, :]
        attention = attention[:, :L, :L]
    # TODO(synk): attention_dropout > 0.0 would need pltpu.prng_* in-kernel;
    # the module uses 0.0 (identity), so dropout is omitted.
    return context, attention


# ---------------------------------------------------------------------------
# Reference + test
# ---------------------------------------------------------------------------

def _reference(q, k, v, scale=None, attn_mask=None, causal=False):
    s = jnp.einsum("bld,bmd->blm", q, k)
    if scale:
        s = s * scale
    L = q.shape[1]
    if causal:
        cm = jnp.triu(jnp.ones((L, L), dtype=jnp.bool_), k=1)
        s = jnp.where(cm, -jnp.inf, s)
    if attn_mask is not None:
        s = jnp.where(attn_mask != 0, -jnp.inf, s)
    p = jax.nn.softmax(s, axis=2)
    ctx = jnp.einsum("blm,bmd->bld", p, v) + q
    return ctx, p


if __name__ == "__main__":
    key = jax.random.PRNGKey(0)
    kq, kk, kv_ = jax.random.split(key, 3)

    B, L, D = 2, 8, 32
    q = jax.random.normal(kq, (B, L, D), dtype=jnp.float32)
    k = jax.random.normal(kk, (B, L, D), dtype=jnp.float32)
    v = jax.random.normal(kv_, (B, L, D), dtype=jnp.float32)
    scale = 1.0 / float(D) ** 0.5

    # bf16 attention output keeps ~3 decimal digits; MXU precision differences
    # between the kernel and the einsum reference are also covered here.
    tol = dict(atol=2e-2, rtol=2e-2)

    # --- 1) no mask (bf16 attention output by default) ---
    ctx, attn = scaled_dot_product_attention(q, k, v, scale=scale)
    jax.block_until_ready((ctx, attn))
    ref_ctx, ref_attn = _reference(q, k, v, scale=scale)
    assert ctx.shape == (B, L, D) and attn.shape == (B, L, L)
    assert jnp.allclose(ctx, ref_ctx, **tol)
    assert jnp.allclose(attn.astype(jnp.float32), ref_attn, **tol)
    assert jnp.allclose(jnp.sum(attn.astype(jnp.float32), axis=-1), 1.0, atol=2e-2)

    # --- 2) per-batch (B, L, L) mask (upper-triangular: no fully-masked rows) ---
    tri = jnp.triu(jnp.ones((L, L), dtype=jnp.bool_), k=1)
    mask_b = jnp.broadcast_to(tri, (B, L, L))
    ctx_m, attn_m = scaled_dot_product_attention(q, k, v, scale=scale,
                                                 attn_mask=mask_b)
    jax.block_until_ready((ctx_m, attn_m))
    ref_ctx_m, ref_attn_m = _reference(q, k, v, scale=scale, attn_mask=mask_b)
    assert jnp.allclose(ctx_m, ref_ctx_m, **tol)
    assert jnp.allclose(attn_m.astype(jnp.float32), ref_attn_m, **tol)

    # --- 3) batch-broadcast (L, L) mask: deduplicated mask DMA path ---
    ctx_bm, attn_bm = scaled_dot_product_attention(q, k, v, scale=scale,
                                                   attn_mask=tri)
    jax.block_until_ready((ctx_bm, attn_bm))
    assert jnp.allclose(ctx_bm, ref_ctx_m, **tol)
    assert jnp.allclose(attn_bm.astype(jnp.float32), ref_attn_m, **tol)

    # --- 4) in-kernel causal mask (no mask input / DMA at all) ---
    ctx_c, attn_c = scaled_dot_product_attention(q, k, v, scale=scale, causal=True)
    jax.block_until_ready((ctx_c, attn_c))
    assert jnp.allclose(ctx_c, ref_ctx_m, **tol)
    assert jnp.allclose(attn_c.astype(jnp.float32), ref_attn_m, **tol)

    # --- 5) ragged L with forced query tiling: exercises sequence padding,
    #        in-kernel pad-key masking and the multi-tile grid (f32 attention) ---
    L2 = 20
    q2 = jax.random.normal(kq, (B, L2, D), dtype=jnp.float32)
    k2 = jax.random.normal(kk, (B, L2, D), dtype=jnp.float32)
    v2 = jax.random.normal(kv_, (B, L2, D), dtype=jnp.float32)
    ctx2, attn2 = scaled_dot_product_attention(q2, k2, v2, scale=scale,
                                               attn_dtype=jnp.float32, q_tile=8)
    jax.block_until_ready((ctx2, attn2))
    ref_ctx2, ref_attn2 = _reference(q2, k2, v2, scale=scale)
    assert ctx2.shape == (B, L2, D) and attn2.shape == (B, L2, L2)
    assert jnp.allclose(ctx2, ref_ctx2, **tol)
    assert jnp.allclose(attn2, ref_attn2, **tol)
    assert jnp.allclose(jnp.sum(attn2, axis=-1), 1.0, atol=1e-3)

    print("KERNEL_OK")
</pallas_src>

<mosaic_0001>
module attributes {stable_mosaic.version = 11 : i64} {
  func.func @_attn_kernel_nomask(%arg0: i32, %arg1: i32, %arg2: memref<2x8x32xf32, #tpu.memory_space<vmem>>, %arg3: memref<2x8x32xf32, #tpu.memory_space<vmem>>, %arg4: memref<2x8x32xf32, #tpu.memory_space<vmem>>, %arg5: memref<2x8x32xf32, #tpu.memory_space<vmem>>, %arg6: memref<2x8x8xbf16, #tpu.memory_space<vmem>>) attributes {dimension_semantics = [#tpu.dimension_semantics<parallel>, #tpu.dimension_semantics<parallel>], iteration_bounds = array<i64: 1, 1>, scalar_prefetch = 0 : i64, scratch_operands = 0 : i64, tpu.core_type = #tpu.core_type<tc>, window_params = [{transform_indices = @transform_0, window_bounds = array<i64: 2, 8, 32>}, {transform_indices = @transform_1, window_bounds = array<i64: 2, 8, 32>}, {transform_indices = @transform_2, window_bounds = array<i64: 2, 8, 32>}, {transform_indices = @transform_3, window_bounds = array<i64: 2, 8, 32>}, {transform_indices = @transform_4, window_bounds = array<i64: 2, 8, 8>}]} {
    %c0 = arith.constant 0 : index
    %c0_0 = arith.constant 0 : index
    %c0_1 = arith.constant 0 : index
    %0 = vector.load %arg2[%c0, %c0_0, %c0_1] : memref<2x8x32xf32, #tpu.memory_space<vmem>>, vector<2x8x32xf32>
    %c0_2 = arith.constant 0 : index
    %c0_3 = arith.constant 0 : index
    %c0_4 = arith.constant 0 : index
    %1 = vector.load %arg3[%c0_2, %c0_3, %c0_4] : memref<2x8x32xf32, #tpu.memory_space<vmem>>, vector<2x8x32xf32>
    %c0_5 = arith.constant 0 : index
    %c0_6 = arith.constant 0 : index
    %c0_7 = arith.constant 0 : index
    %2 = vector.load %arg4[%c0_5, %c0_6, %c0_7] : memref<2x8x32xf32, #tpu.memory_space<vmem>>, vector<2x8x32xf32>
    %cst = arith.constant 0.176776692 : f32
    %3 = vector.broadcast %cst : f32 to vector<2x8x32xf32>
    %4 = arith.mulf %0, %3 : vector<2x8x32xf32>
    %cst_8 = arith.constant dense<0.000000e+00> : vector<2x8x8xf32>
    %5 = tpu.matmul %4, %1, %cst_8 {dimension_numbers = #tpu.dot_dimension_numbers<[2], [2], [1], [1], [0, 0, 0, 1, 1, 1], [0], [0]>} : vector<2x8x32xf32>, vector<2x8x32xf32>, vector<2x8x8xf32> -> vector<2x8x8xf32>
    %cst_9 = arith.constant dense<0xFF800000> : vector<2x8xf32>
    %6 = vector.multi_reduction <maximumf>, %5, %cst_9 [2] : vector<2x8x8xf32> to vector<2x8xf32>
    %7 = vector.shape_cast %6 : vector<2x8xf32> to vector<2x8x1xf32>
    %8 = vector.broadcast %7 : vector<2x8x1xf32> to vector<2x8x8xf32>
    %9 = arith.subf %5, %8 : vector<2x8x8xf32>
    %10 = math.exp %9 : vector<2x8x8xf32>
    %cst_10 = arith.constant dense<0.000000e+00> : vector<2x8xf32>
    %11 = vector.multi_reduction <add>, %10, %cst_10 [2] : vector<2x8x8xf32> to vector<2x8xf32>
    %12 = vector.shape_cast %11 : vector<2x8xf32> to vector<2x8x1xf32>
    %13 = tpu.reciprocal %12 : vector<2x8x1xf32> -> vector<2x8x1xf32>
    %14 = vector.broadcast %13 : vector<2x8x1xf32> to vector<2x8x8xf32>
    %15 = arith.mulf %10, %14 : vector<2x8x8xf32>
    %16 = arith.truncf %15 : vector<2x8x8xf32> to vector<2x8x8xbf16>
    %c0_11 = arith.constant 0 : index
    %c0_12 = arith.constant 0 : index
    %c0_13 = arith.constant 0 : index
    %17 = vector.load %arg6[%c0_11, %c0_12, %c0_13] : memref<2x8x8xbf16, #tpu.memory_space<vmem>>, vector<2x8x8xbf16>
    tpu.vector_store %arg6[%c0_11, %c0_12, %c0_13], %16 {strides = array<i32>} : memref<2x8x8xbf16, #tpu.memory_space<vmem>>, vector<2x8x8xbf16>,
    %cst_14 = arith.constant dense<0.000000e+00> : vector<2x8x32xf32>
    %18 = tpu.matmul %15, %2, %cst_14 {dimension_numbers = #tpu.dot_dimension_numbers<[2], [1], [1], [2], [0, 0, 0, 1, 1, 2], [0], [0]>} : vector<2x8x8xf32>, vector<2x8x32xf32>, vector<2x8x32xf32> -> vector<2x8x32xf32>
    %19 = arith.addf %18, %0 : vector<2x8x32xf32>
    %c0_15 = arith.constant 0 : index
    %c0_16 = arith.constant 0 : index
    %c0_17 = arith.constant 0 : index
    %20 = vector.load %arg5[%c0_15, %c0_16, %c0_17] : memref<2x8x32xf32, #tpu.memory_space<vmem>>, vector<2x8x32xf32>
    tpu.vector_store %arg5[%c0_15, %c0_16, %c0_17], %19 {strides = array<i32>} : memref<2x8x32xf32, #tpu.memory_space<vmem>>, vector<2x8x32xf32>,
    return
  }
  func.func @transform_0(%arg0: i32, %arg1: i32) -> (i32, i32, i32) {
    %c0_i32 = arith.constant 0 : i32
    %c0_i32_0 = arith.constant 0 : i32
    return %arg0, %arg1, %c0_i32 : i32, i32, i32
  }
  func.func @transform_1(%arg0: i32, %arg1: i32) -> (i32, i32, i32) {
    %c0_i32 = arith.constant 0 : i32
    %c0_i32_0 = arith.constant 0 : i32
    %c0_i32_1 = arith.constant 0 : i32
    return %arg0, %c0_i32, %c0_i32_0 : i32, i32, i32
  }
  func.func @transform_2(%arg0: i32, %arg1: i32) -> (i32, i32, i32) {
    %c0_i32 = arith.constant 0 : i32
    %c0_i32_0 = arith.constant 0 : i32
    %c0_i32_1 = arith.constant 0 : i32
    return %arg0, %c0_i32, %c0_i32_0 : i32, i32, i32
  }
  func.func @transform_3(%arg0: i32, %arg1: i32) -> (i32, i32, i32) {
    %c0_i32 = arith.constant 0 : i32
    %c0_i32_0 = arith.constant 0 : i32
    return %arg0, %arg1, %c0_i32 : i32, i32, i32
  }
  func.func @transform_4(%arg0: i32, %arg1: i32) -> (i32, i32, i32) {
    %c0_i32 = arith.constant 0 : i32
    %c0_i32_0 = arith.constant 0 : i32
    return %arg0, %arg1, %c0_i32 : i32, i32, i32
  }
}

</mosaic_0001>

<llo_original>
// kernel: tpu_custom_call.1
$region0: #{tpu_custom_call.1}
  #allocation0 [shape = 'u32[]', space=smem, size = 0x4, offset = 0x4, fixed_abs, tag = 'smem constant byte address 0x4 - core index']
  #allocation1 [shape = 'u32[144,128]{1,0:T(1,128)}', space=vmem, size = 0x12000, scoped, tag = 'internal scratch']
  %s0 = inlined_call_operand.hbm [shape: f32[2,8,32], index: 0, kind: input, shape index: {}]
  %s1 = inlined_call_operand.hbm [shape: f32[2,8,32], index: 1, kind: input, shape index: {}]
  %s2 = inlined_call_operand.hbm [shape: f32[2,8,32], index: 2, kind: input, shape index: {}]
  %s3 = inlined_call_operand.hbm [shape: f32[2,8,32], index: 3, kind: output, shape index: {0}]
  %s4 = inlined_call_operand.hbm [shape: bf16[2,8,8], index: 4, kind: output, shape index: {1}]
  %5 = xla_tuple %s3, %s4
  %s6 = sld [smem:[#allocation0]]
  $region42: #{tpu_custom_call.1} parent=0
    _
  %s8 = ssub.s32 1, %s6
  %s9 = scalar_select 0, %s8, %s6
  $region1: #{tpu_custom_call.1} parent=0
    #allocation2 [shape = 'u8[8192]{0}', space=vmem, size = 0x2000, scoped, tag = 'input window, operand 0, single buffered']
    #allocation3 [shape = 's32[1]{0}', space=sflag, size = 0x4, scoped, tag = 'scoped memory for tpu_custom_call.1']
    #allocation4 [shape = 's32[1]{0}', space=sflag, size = 0x4, scoped, tag = 'scoped memory for tpu_custom_call.1']
    #allocation5 [shape = 'u8[8192]{0}', space=vmem, size = 0x2000, scoped, tag = 'input window, operand 1, single buffered']
    #allocation6 [shape = 's32[1]{0}', space=sflag, size = 0x4, scoped, tag = 'scoped memory for tpu_custom_call.1']
    #allocation7 [shape = 'u8[8192]{0}', space=vmem, size = 0x2000, scoped, tag = 'input window, operand 2, single buffered']
    #allocation8 [shape = 'u8[8192]{0}', space=vmem, size = 0x2000, scoped, tag = 'output window, operand 0, single buffered']
    #allocation9 [shape = 'u8[4096]{0}', space=vmem, size = 0x1000, scoped, tag = 'output window, operand 1, single buffered']
    #allocation10 [shape = 's32[1]{0}', space=sflag, size = 0x4, scoped, tag = 'scoped memory for tpu_custom_call.1']
    %10 = vsyncpa [#allocation3], 0
    %11 = vsyncpa [#allocation6], 0
    %12 = vsyncpa [#allocation4], 0
    %13 = vsyncpa [#allocation10], 0
    // Predicated region
    $region2: #{tpu_custom_call.1} parent=1 // pred_check
      _
    $region3: #{tpu_custom_call.1} parent=1 // pred_check_branch
      %15 = sbr.rel (0) target = $region5
    $region4: #{tpu_custom_call.1} parent=1 // pred_region
      %s17 = ssub.s32 256, 256
      %18 = vsyncadd [#allocation3], %s17
      %s19 = sshll.u32 [#allocation2], 4
      %s20 = int_to_ptr.vmem [resolvable:$true] %s19
      %25 = dma.hbm_to_vmem [thread:$0]  %s0, 256, %s20, [#allocation3], 128, 128, 8
    $region5: #{tpu_custom_call.1} parent=1 // pred_fallthru
      _
    // Predicated region
    $region6: #{tpu_custom_call.1} parent=1 // pred_check
      _
    $region7: #{tpu_custom_call.1} parent=1 // pred_check_branch
      %27 = sbr.rel (0) target = $region9
    $region8: #{tpu_custom_call.1} parent=1 // pred_region
      %s29 = ssub.s32 256, 256
      %30 = vsyncadd [#allocation6], %s29
      %s31 = sshll.u32 [#allocation5], 4
      %s32 = int_to_ptr.vmem [resolvable:$true] %s31
      %37 = dma.hbm_to_vmem [thread:$0]  %s1, 256, %s32, [#allocation6], 128, 128, 8
    $region9: #{tpu_custom_call.1} parent=1 // pred_fallthru
      _
    // Predicated region
    $region10: #{tpu_custom_call.1} parent=1 // pred_check
      _
    $region11: #{tpu_custom_call.1} parent=1 // pred_check_branch
      %39 = sbr.rel (0) target = $region13
    $region12: #{tpu_custom_call.1} parent=1 // pred_region
      %s41 = ssub.s32 256, 256
      %42 = vsyncadd [#allocation6], %s41
      %s43 = sshll.u32 [#allocation7], 4
      %s44 = int_to_ptr.vmem [resolvable:$true] %s43
      %49 = dma.hbm_to_vmem [thread:$0]  %s2, 256, %s44, [#allocation6], 128, 128, 8
    $region13: #{tpu_custom_call.1} parent=1 // pred_fallthru
      _
    // Predicated region
    $region14: #{tpu_custom_call.1} parent=1 // pred_check
      _
    $region15: #{tpu_custom_call.1} parent=1 // pred_check_branch
      %51 = sbr.rel (0) target = $region17
    $region16: #{tpu_custom_call.1} parent=1 // pred_region
      %52 = dma.done [#allocation3], 256
    $region17: #{tpu_custom_call.1} parent=1 // pred_fallthru
      _
    // Predicated region
    $region18: #{tpu_custom_call.1} parent=1 // pred_check
      _
    $region19: #{tpu_custom_call.1} parent=1 // pred_check_branch
      %54 = sbr.rel (0) target = $region21
    $region20: #{tpu_custom_call.1} parent=1 // pred_region
      %55 = dma.done [#allocation6], 256
    $region21: #{tpu_custom_call.1} parent=1 // pred_fallthru
      _
    // Predicated region
    $region22: #{tpu_custom_call.1} parent=1 // pred_check
      _
    $region23: #{tpu_custom_call.1} parent=1 // pred_check_branch
      %57 = sbr.rel (0) target = $region25
    $region24: #{tpu_custom_call.1} parent=1 // pred_region
      %58 = dma.done [#allocation6], 256
    $region25: #{tpu_custom_call.1} parent=1 // pred_fallthru
      _
    %v59 = vld [vmem:[#allocation2] sm:$0xff]
    %v60 = vld [vmem:[#allocation2 + $0x8] sm:$0xff]
    %v61 = vld [vmem:[#allocation5] sm:$0xff]
    %v62 = vld [vmem:[#allocation5 + $0x8] sm:$0xff]
    %v63 = vld [vmem:[#allocation7] sm:$0xff]
    %v64 = vld [vmem:[#allocation7 + $0x8] sm:$0xff]
    %v65 = vmul.f32 %v59, 0.17677669
    %v66 = vmul.f32 %v60, 0.17677669
    %vm67 = vcmask 261120
    %v69 = vsel %vm67, %v65, 0
    %v72 = vsel %vm67, %v61, 0
    %74 = vmatprep.subr.mxu0 0.0
    %75 = vmatpush1.xpose.msra.mxu0 %v72
    %76 = vmatprep.subr.mxu0 0.0
    %77 = vmatpush1.xpose.msra.mxu0 0.0
    %78 = vmatprep.subr.mxu0 0.0
    %79 = vmatpush1.xpose.msra.mxu0 0.0
    %80 = vmatprep.subr.mxu0 0.0
    %81 = vmatpush1.xpose.msra.mxu0 0.0
    %82 = vmatprep.subr.mxu0 0.0
    %83 = vmatpush1.xpose.msra.mxu0 0.0
    %84 = vmatprep.subr.mxu0 0.0
    %85 = vmatpush1.xpose.msra.mxu0 0.0
    %86 = vmatprep.subr.mxu0 0.0
    %87 = vmatpush1.xpose.msra.mxu0 0.0
    %88 = vmatprep.subr.mxu0 0.0
    %89 = vmatpush1.xpose.msra.mxu0 0.0
    %90 = vmatprep.subr.mxu0 0.0
    %91 = vmatpush1.xpose.msra.mxu0 0.0
    %92 = vmatprep.subr.mxu0 0.0
    %93 = vmatpush1.xpose.msra.mxu0 0.0
    %94 = vmatprep.subr.mxu0 0.0
    %95 = vmatpush1.xpose.msra.mxu0 0.0
    %96 = vmatprep.subr.mxu0 0.0
    %97 = vmatpush1.xpose.msra.mxu0 0.0
    %98 = vmatprep.subr.mxu0 0.0
    %99 = vmatpush1.xpose.msra.mxu0 0.0
    %100 = vmatprep.subr.mxu0 0.0
    %101 = vmatpush1.xpose.msra.mxu0 0.0
    %102 = vmatprep.subr.mxu0 0.0
    %103 = vmatpush1.xpose.msra.mxu0 0.0
    %104 = vmatprep.subr.mxu0 0.0
    %105 = vmatpush1.xpose.msra.mxu0 0.0
    %106 = vmatprep.subr.mxu0 0.0
    %107 = vmatpush1.xpose.msra.mxu0 0.0
    %108 = vmatprep.subr.mxu0 0.0
    %109 = vmatpush1.xpose.msra.mxu0 0.0
    %110 = vmatprep.subr.mxu0 0.0
    %111 = vmatpush1.xpose.msra.mxu0 0.0
    %112 = vmatprep.subr.mxu0 0.0
    %113 = vmatpush1.xpose.msra.mxu0 0.0
    %114 = vmatprep.subr.mxu0 0.0
    %115 = vmatpush1.xpose.msra.mxu0 0.0
    %116 = vmatprep.subr.mxu0 0.0
    %117 = vmatpush1.xpose.msra.mxu0 0.0
    %118 = vmatprep.subr.mxu0 0.0
    %119 = vmatpush1.xpose.msra.mxu0 0.0
    %120 = vmatprep.subr.mxu0 0.0
    %121 = vmatpush1.xpose.msra.mxu0 0.0
    %122 = vmatprep.subr.mxu0 0.0
    %123 = vmatpush1.xpose.msra.mxu0 0.0
    %124 = vmatprep.subr.mxu0 0.0
    %125 = vmatpush1.xpose.msra.mxu0 0.0
    %126 = vmatprep.subr.mxu0 0.0
    %127 = vmatpush1.xpose.msra.mxu0 0.0
    %128 = vmatprep.subr.mxu0 0.0
    %129 = vmatpush1.xpose.msra.mxu0 0.0
    %130 = vmatprep.subr.mxu0 0.0
    %131 = vmatpush1.xpose.msra.mxu0 0.0
    %132 = vmatprep.subr.mxu0 0.0
    %133 = vmatpush1.xpose.msra.mxu0 0.0
    %134 = vmatprep.subr.mxu0 0.0
    %135 = vmatpush1.xpose.msra.mxu0 0.0
    %136 = vmatprep.subr.mxu0 0.0
    %137 = vmatpush1.xpose.msra.mxu0 0.0
    %138 = vmatprep.mubr.f32.mxu0 0.0
    %139 = vmatmul.mubr.f32.gmra.mrb[0].mxu0 %v69
    %v140 = vpop.f32.mrb[0].mxu0
    %v141 = vadd.f32 0.0, %v140
    %v142 = vpop.f32.mrb[0].mxu0
    %143 = vdwg.mxu0
    %v145 = vsel %vm67, %v66, 0
    %v148 = vsel %vm67, %v62, 0
    %150 = vmatprep.subr.mxu0 0.0
    %151 = vmatpush1.xpose.msra.mxu0 %v148
    %152 = vmatprep.subr.mxu0 0.0
    %153 = vmatpush1.xpose.msra.mxu0 0.0
    %154 = vmatprep.subr.mxu0 0.0
    %155 = vmatpush1.xpose.msra.mxu0 0.0
    %156 = vmatprep.subr.mxu0 0.0
    %157 = vmatpush1.xpose.msra.mxu0 0.0
    %158 = vmatprep.subr.mxu0 0.0
    %159 = vmatpush1.xpose.msra.mxu0 0.0
    %160 = vmatprep.subr.mxu0 0.0
    %161 = vmatpush1.xpose.msra.mxu0 0.0
    %162 = vmatprep.subr.mxu0 0.0
    %163 = vmatpush1.xpose.msra.mxu0 0.0
    %164 = vmatprep.subr.mxu0 0.0
    %165 = vmatpush1.xpose.msra.mxu0 0.0
    %166 = vmatprep.subr.mxu0 0.0
    %167 = vmatpush1.xpose.msra.mxu0 0.0
    %168 = vmatprep.subr.mxu0 0.0
    %169 = vmatpush1.xpose.msra.mxu0 0.0
    %170 = vmatprep.subr.mxu0 0.0
    %171 = vmatpush1.xpose.msra.mxu0 0.0
    %172 = vmatprep.subr.mxu0 0.0
    %173 = vmatpush1.xpose.msra.mxu0 0.0
    %174 = vmatprep.subr.mxu0 0.0
    %175 = vmatpush1.xpose.msra.mxu0 0.0
    %176 = vmatprep.subr.mxu0 0.0
    %177 = vmatpush1.xpose.msra.mxu0 0.0
    %178 = vmatprep.subr.mxu0 0.0
    %179 = vmatpush1.xpose.msra.mxu0 0.0
    %180 = vmatprep.subr.mxu0 0.0
    %181 = vmatpush1.xpose.msra.mxu0 0.0
    %182 = vmatprep.subr.mxu0 0.0
    %183 = vmatpush1.xpose.msra.mxu0 0.0
    %184 = vmatprep.subr.mxu0 0.0
    %185 = vmatpush1.xpose.msra.mxu0 0.0
    %186 = vmatprep.subr.mxu0 0.0
    %187 = vmatpush1.xpose.msra.mxu0 0.0
    %188 = vmatprep.subr.mxu0 0.0
    %189 = vmatpush1.xpose.msra.mxu0 0.0
    %190 = vmatprep.subr.mxu0 0.0
    %191 = vmatpush1.xpose.msra.mxu0 0.0
    %192 = vmatprep.subr.mxu0 0.0
    %193 = vmatpush1.xpose.msra.mxu0 0.0
    %194 = vmatprep.subr.mxu0 0.0
    %195 = vmatpush1.xpose.msra.mxu0 0.0
    %196 = vmatprep.subr.mxu0 0.0
    %197 = vmatpush1.xpose.msra.mxu0 0.0
    %198 = vmatprep.subr.mxu0 0.0
    %199 = vmatpush1.xpose.msra.mxu0 0.0
    %200 = vmatprep.subr.mxu0 0.0
    %201 = vmatpush1.xpose.msra.mxu0 0.0
    %202 = vmatprep.subr.mxu0 0.0
    %203 = vmatpush1.xpose.msra.mxu0 0.0
    %204 = vmatprep.subr.mxu0 0.0
    %205 = vmatpush1.xpose.msra.mxu0 0.0
    %206 = vmatprep.subr.mxu0 0.0
    %207 = vmatpush1.xpose.msra.mxu0 0.0
    %208 = vmatprep.subr.mxu0 0.0
    %209 = vmatpush1.xpose.msra.mxu0 0.0
    %210 = vmatprep.subr.mxu0 0.0
    %211 = vmatpush1.xpose.msra.mxu0 0.0
    %212 = vmatprep.subr.mxu0 0.0
    %213 = vmatpush1.xpose.msra.mxu0 0.0
    %214 = vmatprep.mubr.f32.mxu0 0.0
    %215 = vmatmul.mubr.f32.gmra.mrb[0].mxu0 %v145
    %v216 = vpop.f32.mrb[0].mxu0
    %v217 = vadd.f32 0.0, %v216
    %v218 = vpop.f32.mrb[0].mxu0
    %219 = vdwg.mxu0
    %vm220 = vcmask 64512
    %v221 = vsel %vm220, %v141, -inf
    %222 = vmax.xlane.f32.xlu0 %v221
    %v223 = vpop.xlane.xlu0 %222
    %v224 = vsel %vm220, %v217, -inf
    %225 = vmax.xlane.f32.xlu0 %v224
    %v226 = vpop.xlane.xlu0 %225
    %v227 = vsub.f32 %v141, %v223
    %v228 = vsub.f32 %v217, %v226
    %v229 = vmul.f32 %v227, 1.442695
    %v230 = vpow.pop %v229
    %v231 = vmul.f32 %v228, 1.442695
    %v232 = vpow.pop %v231
    %v233 = vsel %vm220, %v230, 0.0
    %234 = vadd.xlane.f32.xlu0 %v233
    %v235 = vpop.xlane.xlu0 %234
    %v236 = vsel %vm220, %v232, 0.0
    %237 = vadd.xlane.f32.xlu0 %v236
    %v238 = vpop.xlane.xlu0 %237
    %v239 = vrcp.pop %v235
    %v240 = vrcp.pop %v238
    %v241 = vmul.f32 %v230, %v239
    %v242 = vmul.f32 %v232, %v240
    %v243 = vpack.c.bf16 %v241, %v241
    %v244 = vpack.c.bf16 %v242, %v242
    %vm245 = vcmask 60416
    %246 = vst.msk [vmem:[#allocation9] sm:$0xf] %vm245, %v243
    %247 = vst.msk [vmem:[#allocation9 + $0x4] sm:$0xf] %vm245, %v244
    %v249 = vsel %vm220, %v241, 0
    %251 = vmatprep.subr.mxu0 0.0
    %252 = vmatpush1.msra.mxu0 %v63
    %253 = vmatprep.subr.mxu0 0.0
    %254 = vmatpush1.msra.mxu0 0.0
    %255 = vmatprep.subr.mxu0 0.0
    %256 = vmatpush1.msra.mxu0 0.0
    %257 = vmatprep.subr.mxu0 0.0
    %258 = vmatpush1.msra.mxu0 0.0
    %259 = vmatprep.subr.mxu0 0.0
    %260 = vmatpush1.msra.mxu0 0.0
    %261 = vmatprep.subr.mxu0 0.0
    %262 = vmatpush1.msra.mxu0 0.0
    %263 = vmatprep.subr.mxu0 0.0
    %264 = vmatpush1.msra.mxu0 0.0
    %265 = vmatprep.subr.mxu0 0.0
    %266 = vmatpush1.msra.mxu0 0.0
    %267 = vmatprep.subr.mxu0 0.0
    %268 = vmatpush1.msra.mxu0 0.0
    %269 = vmatprep.subr.mxu0 0.0
    %270 = vmatpush1.msra.mxu0 0.0
    %271 = vmatprep.subr.mxu0 0.0
    %272 = vmatpush1.msra.mxu0 0.0
    %273 = vmatprep.subr.mxu0 0.0
    %274 = vmatpush1.msra.mxu0 0.0
    %275 = vmatprep.subr.mxu0 0.0
    %276 = vmatpush1.msra.mxu0 0.0
    %277 = vmatprep.subr.mxu0 0.0
    %278 = vmatpush1.msra.mxu0 0.0
    %279 = vmatprep.subr.mxu0 0.0
    %280 = vmatpush1.msra.mxu0 0.0
    %281 = vmatprep.subr.mxu0 0.0
    %282 = vmatpush1.msra.mxu0 0.0
    %283 = vmatprep.subr.mxu0 0.0
    %284 = vmatpush1.msra.mxu0 0.0
    %285 = vmatprep.subr.mxu0 0.0
    %286 = vmatpush1.msra.mxu0 0.0
    %287 = vmatprep.subr.mxu0 0.0
    %288 = vmatpush1.msra.mxu0 0.0
    %289 = vmatprep.subr.mxu0 0.0
    %290 = vmatpush1.msra.mxu0 0.0
    %291 = vmatprep.subr.mxu0 0.0
    %292 = vmatpush1.msra.mxu0 0.0
    %293 = vmatprep.subr.mxu0 0.0
    %294 = vmatpush1.msra.mxu0 0.0
    %295 = vmatprep.subr.mxu0 0.0
    %296 = vmatpush1.msra.mxu0 0.0
    %297 = vmatprep.subr.mxu0 0.0
    %298 = vmatpush1.msra.mxu0 0.0
    %299 = vmatprep.subr.mxu0 0.0
    %300 = vmatpush1.msra.mxu0 0.0
    %301 = vmatprep.subr.mxu0 0.0
    %302 = vmatpush1.msra.mxu0 0.0
    %303 = vmatprep.subr.mxu0 0.0
    %304 = vmatpush1.msra.mxu0 0.0
    %305 = vmatprep.subr.mxu0 0.0
    %306 = vmatpush1.msra.mxu0 0.0
    %307 = vmatprep.subr.mxu0 0.0
    %308 = vmatpush1.msra.mxu0 0.0
    %309 = vmatprep.subr.mxu0 0.0
    %310 = vmatpush1.msra.mxu0 0.0
    %311 = vmatprep.subr.mxu0 0.0
    %312 = vmatpush1.msra.mxu0 0.0
    %313 = vmatprep.subr.mxu0 0.0
    %314 = vmatpush1.msra.mxu0 0.0
    %315 = vmatprep.mubr.f32.mxu0 0.0
    %316 = vmatmul.mubr.f32.gmra.mrb[0].mxu0 %v249
    %v317 = vpop.f32.mrb[0].mxu0
    %v318 = vadd.f32 %v59, %v317
    %v319 = vpop.f32.mrb[0].mxu0
    %320 = vdwg.mxu0
    %v322 = vsel %vm220, %v242, 0
    %324 = vmatprep.subr.mxu0 0.0
    %325 = vmatpush1.msra.mxu0 %v64
    %326 = vmatprep.subr.mxu0 0.0
    %327 = vmatpush1.msra.mxu0 0.0
    %328 = vmatprep.subr.mxu0 0.0
    %329 = vmatpush1.msra.mxu0 0.0
    %330 = vmatprep.subr.mxu0 0.0
    %331 = vmatpush1.msra.mxu0 0.0
    %332 = vmatprep.subr.mxu0 0.0
    %333 = vmatpush1.msra.mxu0 0.0
    %334 = vmatprep.subr.mxu0 0.0
    %335 = vmatpush1.msra.mxu0 0.0
    %336 = vmatprep.subr.mxu0 0.0
    %337 = vmatpush1.msra.mxu0 0.0
    %338 = vmatprep.subr.mxu0 0.0
    %339 = vmatpush1.msra.mxu0 0.0
    %340 = vmatprep.subr.mxu0 0.0
    %341 = vmatpush1.msra.mxu0 0.0
    %342 = vmatprep.subr.mxu0 0.0
    %343 = vmatpush1.msra.mxu0 0.0
    %344 = vmatprep.subr.mxu0 0.0
    %345 = vmatpush1.msra.mxu0 0.0
    %346 = vmatprep.subr.mxu0 0.0
    %347 = vmatpush1.msra.mxu0 0.0
    %348 = vmatprep.subr.mxu0 0.0
    %349 = vmatpush1.msra.mxu0 0.0
    %350 = vmatprep.subr.mxu0 0.0
    %351 = vmatpush1.msra.mxu0 0.0
    %352 = vmatprep.subr.mxu0 0.0
    %353 = vmatpush1.msra.mxu0 0.0
    %354 = vmatprep.subr.mxu0 0.0
    %355 = vmatpush1.msra.mxu0 0.0
    %356 = vmatprep.subr.mxu0 0.0
    %357 = vmatpush1.msra.mxu0 0.0
    %358 = vmatprep.subr.mxu0 0.0
    %359 = vmatpush1.msra.mxu0 0.0
    %360 = vmatprep.subr.mxu0 0.0
    %361 = vmatpush1.msra.mxu0 0.0
    %362 = vmatprep.subr.mxu0 0.0
    %363 = vmatpush1.msra.mxu0 0.0
    %364 = vmatprep.subr.mxu0 0.0
    %365 = vmatpush1.msra.mxu0 0.0
    %366 = vmatprep.subr.mxu0 0.0
    %367 = vmatpush1.msra.mxu0 0.0
    %368 = vmatprep.subr.mxu0 0.0
    %369 = vmatpush1.msra.mxu0 0.0
    %370 = vmatprep.subr.mxu0 0.0
    %371 = vmatpush1.msra.mxu0 0.0
    %372 = vmatprep.subr.mxu0 0.0
    %373 = vmatpush1.msra.mxu0 0.0
    %374 = vmatprep.subr.mxu0 0.0
    %375 = vmatpush1.msra.mxu0 0.0
    %376 = vmatprep.subr.mxu0 0.0
    %377 = vmatpush1.msra.mxu0 0.0
    %378 = vmatprep.subr.mxu0 0.0
    %379 = vmatpush1.msra.mxu0 0.0
    %380 = vmatprep.subr.mxu0 0.0
    %381 = vmatpush1.msra.mxu0 0.0
    %382 = vmatprep.subr.mxu0 0.0
    %383 = vmatpush1.msra.mxu0 0.0
    %384 = vmatprep.subr.mxu0 0.0
    %385 = vmatpush1.msra.mxu0 0.0
    %386 = vmatprep.subr.mxu0 0.0
    %387 = vmatpush1.msra.mxu0 0.0
    %388 = vmatprep.mubr.f32.mxu0 0.0
    %389 = vmatmul.mubr.f32.gmra.mrb[0].mxu0 %v322
    %v390 = vpop.f32.mrb[0].mxu0
    %v391 = vadd.f32 %v60, %v390
    %v392 = vpop.f32.mrb[0].mxu0
    %393 = vdwg.mxu0
    %394 = vst.msk [vmem:[#allocation8] sm:$0xff] %vm67, %v318
    %395 = vst.msk [vmem:[#allocation8 + $0x8] sm:$0xff] %vm67, %v391
    // Predicated region
    $region26: #{tpu_custom_call.1} parent=1 // pred_check
      _
    $region27: #{tpu_custom_call.1} parent=1 // pred_check_branch
      %397 = sbr.rel (0) target = $region29
    $region28: #{tpu_custom_call.1} parent=1 // pred_region
      %s399 = ssub.s32 256, 256
      %400 = vsyncadd [#allocation4], %s399
      %s401 = sshll.u32 [#allocation8], 4
      %s402 = int_to_ptr.vmem [resolvable:$true] %s401
      %407 = dma.vmem_to_hbm [thread:$0]  %s402, 256, %s3, [#allocation4], 128, 128, 8
    $region29: #{tpu_custom_call.1} parent=1 // pred_fallthru
      _
    // Predicated region
    $region30: #{tpu_custom_call.1} parent=1 // pred_check
      _
    $region31: #{tpu_custom_call.1} parent=1 // pred_check_branch
      %409 = sbr.rel (0) target = $region33
    $region32: #{tpu_custom_call.1} parent=1 // pred_region
      %s411 = ssub.s32 128, 128
      %412 = vsyncadd [#allocation10], %s411
      %s413 = sshll.u32 [#allocation9], 4
      %s414 = int_to_ptr.vmem [resolvable:$true] %s413
      %419 = dma.vmem_to_hbm [thread:$0]  %s414, 128, %s4, [#allocation10], 64, 64, 4
    $region33: #{tpu_custom_call.1} parent=1 // pred_fallthru
      _
    // Predicated region
    $region34: #{tpu_custom_call.1} parent=1 // pred_check
      _
    $region35: #{tpu_custom_call.1} parent=1 // pred_check_branch
      %421 = sbr.rel (0) target = $region37
    $region36: #{tpu_custom_call.1} parent=1 // pred_region
      %422 = dma.done [#allocation4], 256
    $region37: #{tpu_custom_call.1} parent=1 // pred_fallthru
      _
    // Predicated region
    $region38: #{tpu_custom_call.1} parent=1 // pred_check
      _
    $region39: #{tpu_custom_call.1} parent=1 // pred_check_branch
      %424 = sbr.rel (0) target = $region41
    $region40: #{tpu_custom_call.1} parent=1 // pred_region
      %425 = dma.done [#allocation10], 128
    $region41: #{tpu_custom_call.1} parent=1 // pred_fallthru
      _
    %426 = vsyncpa [#allocation3], 1
    %427 = vsyncpa [#allocation6], 1
    %428 = vsyncpa [#allocation4], 1
    %429 = vsyncpa [#allocation10], 1

</llo_original>
